<compile_context>
chip_gen: v7x
topology: tpu7x:2x2x1
jax: 0.10.0
libtpu: 0.0.40
codegen_flags: <defaults>
</compile_context>

<pallas_src>
import functools

import jax
import jax.numpy as jnp
from jax.experimental import pallas as pl
from jax.experimental.pallas import tpu as pltpu
import numpy as np


# Dimension numbers for "A @ B.T" (contract the minor dim of both operands).
_NT_DIM_NUMBERS = (((1,), (1,)), ((), ()))


def _channel_attention_kernel(x_ref, w1_ref, w2_ref, o_ref, sum_sc, max_sc,
                              *, hw, thw, masked):
    # x_ref block: (1, C, thw)  (channels on sublanes, spatial on lanes)
    # w1_ref: (Cr, C) ; w2_ref: (C, Cr) ; o_ref block: (1, 1, C)
    # sum_sc / max_sc: (C, 1) f32 accumulators, persistent across the HW axis.
    k = pl.program_id(1)

    @pl.when(k == 0)
    def _init():
        sum_sc[...] = jnp.zeros_like(sum_sc)
        max_sc[...] = jnp.full_like(max_sc, -jnp.inf)

    x = x_ref[0].astype(jnp.float32)                       # (C, thw)

    if masked:
        # Last HW tile may be padded (HW % thw != 0); padded lanes are
        # unspecified, so neutralize them for both reductions.
        lane = jax.lax.broadcasted_iota(jnp.int32, x.shape, 1)
        valid = (k * thw + lane) < hw
        x_sum = jnp.where(valid, x, 0.0)
        x_max = jnp.where(valid, x, -jnp.inf)
    else:
        x_sum = x
        x_max = x

    # Lane-axis (spatial) partial reductions -> (C, 1) columns.
    sum_sc[...] = sum_sc[...] + jnp.sum(x_sum, axis=-1, keepdims=True)
    max_sc[...] = jnp.maximum(max_sc[...], jnp.max(x_max, axis=-1, keepdims=True))

    @pl.when(k == pl.num_programs(1) - 1)
    def _finalize():
        c = sum_sc.shape[0]
        # Fuse the two branches: pooled = [avg | max] as a (C, 2) matrix
        # (built with a lane-select; avoids any concat/relayout).
        sel = jax.lax.broadcasted_iota(jnp.int32, (c, 2), 1) == 0
        pooled = jnp.where(sel, sum_sc[...] * (1.0 / hw), max_sc[...])   # (C, 2)

        w1 = w1_ref[...].astype(jnp.float32)                # (Cr, C)
        w2 = w2_ref[...].astype(jnp.float32)                # (C, Cr)

        h = jnp.maximum(
            jnp.dot(w1, pooled, preferred_element_type=jnp.float32), 0.0)  # (Cr, 2)
        o = jnp.dot(w2, h, preferred_element_type=jnp.float32)             # (C, 2)
        logit = o[:, 0:1] + o[:, 1:2]                                       # (C, 1)

        # (C,1) column -> lane-dense (1,C) row via a tiny NT matmul on the MXU
        # (ones(1,1) @ logit.T), so the output store is a lane-dense row.
        row = jax.lax.dot_general(
            jnp.ones((1, 1), jnp.float32), logit, _NT_DIM_NUMBERS,
            preferred_element_type=jnp.float32)                             # (1, C)
        o_ref[0] = jax.nn.sigmoid(row).astype(o_ref.dtype)


def _pick_spatial_tile(hw, c, itemsize, max_block_bytes):
    """Lanes per grid step along HW: ~max_block_bytes per input block,
    multiple of 128 unless the tile covers the whole spatial extent."""
    target = max(128, max_block_bytes // max(1, c * itemsize))
    if hw <= target:
        return hw                      # single full-extent tile (always legal)
    return max(128, (target // 128) * 128)


def channel_attention(x_nchw, w1, w2, *, max_block_bytes=512 * 1024):
    """x_nchw: (B, C, H, W); w1: (Cr, C) = f1.weight[:, :, 0, 0]; w2: (C, Cr)."""
    B, C, H, W = x_nchw.shape
    Cr = w1.shape[0]
    HW = H * W

    # Free, contiguous view: NCHW -> (B, C, HW). No transpose, no dtype copy.
    x = x_nchw.reshape(B, C, HW)
    w1 = jnp.asarray(w1)
    w2 = jnp.asarray(w2)

    thw = _pick_spatial_tile(HW, C, jnp.dtype(x.dtype).itemsize, max_block_bytes)
    nk = pl.cdiv(HW, thw)
    masked = (HW % thw) != 0

    kernel = functools.partial(
        _channel_attention_kernel, hw=HW, thw=thw, masked=masked)

    out = pl.pallas_call(
        kernel,
        out_shape=jax.ShapeDtypeStruct((B, 1, C), x.dtype),
        grid_spec=pltpu.PrefetchScalarGridSpec(
            num_scalar_prefetch=0,
            grid=(B, nk),                                   # HW reduction last
            in_specs=[
                pl.BlockSpec((1, C, thw), lambda b, k: (b, 0, k)),
                pl.BlockSpec((Cr, C), lambda b, k: (0, 0)),  # resident weights
                pl.BlockSpec((C, Cr), lambda b, k: (0, 0)),  # resident weights
            ],
            out_specs=pl.BlockSpec((1, 1, C), lambda b, k: (b, 0, 0)),
            scratch_shapes=[
                pltpu.VMEM((C, 1), jnp.float32),             # running sum
                pltpu.VMEM((C, 1), jnp.float32),             # running max
            ],
        ),
        compiler_params=pltpu.CompilerParams(
            dimension_semantics=("parallel", "arbitrary"),
            vmem_limit_bytes=32 * 1024 * 1024,
        ),
    )(x, w1, w2)

    # Match PyTorch output shape (B, C, 1, 1); (B,1,C)->(B,C,1,1) is a pure reshape.
    return out.reshape(B, C, 1, 1)


def channel_attention_ref(x_nchw, w1, w2):
    """Pure-JAX reference mirroring the PyTorch forward."""
    x = x_nchw.astype(jnp.float32)
    avg = jnp.mean(x, axis=(2, 3))                          # (B, C)
    mx = jnp.max(x, axis=(2, 3))                            # (B, C)
    w1f = jnp.asarray(w1, jnp.float32)
    w2f = jnp.asarray(w2, jnp.float32)

    def branch(p):
        h = jnp.maximum(p @ w1f.T, 0.0)                     # (B, Cr)
        return h @ w2f.T                                    # (B, C)

    out = jax.nn.sigmoid(branch(avg) + branch(mx))
    B, C = x_nchw.shape[:2]
    return out.reshape(B, C, 1, 1).astype(x_nchw.dtype)


if __name__ == "__main__":
    root_key = jax.random.PRNGKey(0)
    key_a, key_b = jax.random.split(root_key)

    def _check(key, B, C, H, W, ratio):
        Cr = max(C // ratio, 1)
        kx, k1, k2 = jax.random.split(key, 3)
        x = jax.random.normal(kx, (B, C, H, W), dtype=jnp.float32)
        w1 = jax.random.normal(k1, (Cr, C), dtype=jnp.float32) * (1.0 / np.sqrt(C))
        w2 = jax.random.normal(k2, (C, Cr), dtype=jnp.float32) * (1.0 / np.sqrt(Cr))

        out = jax.block_until_ready(channel_attention(x, w1, w2))
        ref = jax.block_until_ready(channel_attention_ref(x, w1, w2))
        np.testing.assert_allclose(np.asarray(out), np.asarray(ref),
                                   rtol=1e-5, atol=1e-5)

    # Small shape implied by the module (in_planes divisible by ratio=16):
    _check(key_a, 2, 64, 16, 16, 16)     # single-tile spatial reduction
    _check(key_b, 1, 64, 48, 48, 16)     # multi-tile reduction + masked tail

    print("KERNEL_OK")
</pallas_src>

<mosaic_0001>
module attributes {stable_mosaic.version = 11 : i64} {
  func.func @_channel_attention_kernel(%arg0: i32, %arg1: i32, %arg2: memref<1x64x256xf32, #tpu.memory_space<vmem>>, %arg3: memref<4x64xf32, #tpu.memory_space<vmem>>, %arg4: memref<64x4xf32, #tpu.memory_space<vmem>>, %arg5: memref<1x1x64xf32, #tpu.memory_space<vmem>>, %arg6: memref<64x1xf32, #tpu.memory_space<vmem>>, %arg7: memref<64x1xf32, #tpu.memory_space<vmem>>) attributes {dimension_semantics = [#tpu.dimension_semantics<parallel>, #tpu.dimension_semantics<arbitrary>], iteration_bounds = array<i64: 2, 1>, scalar_prefetch = 0 : i64, scratch_operands = 2 : i64, tpu.core_type = #tpu.core_type<tc>, window_params = [{transform_indices = @transform_0, window_bounds = array<i64: 1, 64, 256>}, {pipeline_mode = #tpu.pipeline_mode<synchronous>, transform_indices = @transform_1, window_bounds = array<i64: 4, 64>}, {pipeline_mode = #tpu.pipeline_mode<synchronous>, transform_indices = @transform_2, window_bounds = array<i64: 64, 4>}, {transform_indices = @transform_3, window_bounds = array<i64: 1, 1, 64>}]} {
    %c0_i32 = arith.constant 0 : i32
    %0 = arith.cmpi eq, %arg1, %c0_i32 : i32
    %1 = arith.extui %0 : i1 to i32
    %c0_i32_0 = arith.constant 0 : i32
    %2 = arith.cmpi ne, %1, %c0_i32_0 : i32
    scf.if %2 {
      %cst_14 = arith.constant 0.000000e+00 : f32
      %18 = vector.broadcast %cst_14 : f32 to vector<64x1xf32>
      %c0_15 = arith.constant 0 : index
      %c0_16 = arith.constant 0 : index
      %19 = vector.load %arg6[%c0_15, %c0_16] : memref<64x1xf32, #tpu.memory_space<vmem>>, vector<64x1xf32>
      tpu.vector_store %arg6[%c0_15, %c0_16], %18 {strides = array<i32>} : memref<64x1xf32, #tpu.memory_space<vmem>>, vector<64x1xf32>,
      %cst_17 = arith.constant 0xFF800000 : f32
      %20 = vector.broadcast %cst_17 : f32 to vector<64x1xf32>
      %c0_18 = arith.constant 0 : index
      %c0_19 = arith.constant 0 : index
      %21 = vector.load %arg7[%c0_18, %c0_19] : memref<64x1xf32, #tpu.memory_space<vmem>>, vector<64x1xf32>
      tpu.vector_store %arg7[%c0_18, %c0_19], %20 {strides = array<i32>} : memref<64x1xf32, #tpu.memory_space<vmem>>, vector<64x1xf32>,
    } else {
    }
    %c0 = arith.constant 0 : index
    %c0_1 = arith.constant 0 : index
    %c0_2 = arith.constant 0 : index
    %3 = vector.load %arg2[%c0, %c0_1, %c0_2] : memref<1x64x256xf32, #tpu.memory_space<vmem>>, vector<1x64x256xf32>
    %4 = vector.shape_cast %3 : vector<1x64x256xf32> to vector<64x256xf32>
    %c0_3 = arith.constant 0 : index
    %c0_4 = arith.constant 0 : index
    %5 = vector.load %arg6[%c0_3, %c0_4] : memref<64x1xf32, #tpu.memory_space<vmem>>, vector<64x1xf32>
    %cst = arith.constant dense<0.000000e+00> : vector<64xf32>
    %6 = vector.multi_reduction <add>, %4, %cst [1] : vector<64x256xf32> to vector<64xf32>
    %7 = vector.shape_cast %6 : vector<64xf32> to vector<64x1xf32>
    %8 = arith.addf %5, %7 : vector<64x1xf32>
    %c0_5 = arith.constant 0 : index
    %c0_6 = arith.constant 0 : index
    %9 = vector.load %arg6[%c0_5, %c0_6] : memref<64x1xf32, #tpu.memory_space<vmem>>, vector<64x1xf32>
    tpu.vector_store %arg6[%c0_5, %c0_6], %8 {strides = array<i32>} : memref<64x1xf32, #tpu.memory_space<vmem>>, vector<64x1xf32>,
    %c0_7 = arith.constant 0 : index
    %c0_8 = arith.constant 0 : index
    %10 = vector.load %arg7[%c0_7, %c0_8] : memref<64x1xf32, #tpu.memory_space<vmem>>, vector<64x1xf32>
    %cst_9 = arith.constant dense<0xFF800000> : vector<64xf32>
    %11 = vector.multi_reduction <maximumf>, %4, %cst_9 [1] : vector<64x256xf32> to vector<64xf32>
    %12 = vector.shape_cast %11 : vector<64xf32> to vector<64x1xf32>
    %13 = arith.maximumf %10, %12 : vector<64x1xf32>
    %c0_10 = arith.constant 0 : index
    %c0_11 = arith.constant 0 : index
    %14 = vector.load %arg7[%c0_10, %c0_11] : memref<64x1xf32, #tpu.memory_space<vmem>>, vector<64x1xf32>
    tpu.vector_store %arg7[%c0_10, %c0_11], %13 {strides = array<i32>} : memref<64x1xf32, #tpu.memory_space<vmem>>, vector<64x1xf32>,
    %c0_i32_12 = arith.constant 0 : i32
    %15 = arith.cmpi eq, %arg1, %c0_i32_12 : i32
    %16 = arith.extui %15 : i1 to i32
    %c0_i32_13 = arith.constant 0 : i32
    %17 = arith.cmpi ne, %16, %c0_i32_13 : i32
    scf.if %17 {
      %18 = tpu.iota {dimensions = array<i32: 1>} : vector<64x2xi32>
      %c0_i32_14 = arith.constant 0 : i32
      %19 = vector.broadcast %c0_i32_14 : i32 to vector<64x2xi32>
      %20 = arith.cmpi eq, %18, %19 : vector<64x2xi32>
      %c0_15 = arith.constant 0 : index
      %c0_16 = arith.constant 0 : index
      %21 = vector.load %arg6[%c0_15, %c0_16] : memref<64x1xf32, #tpu.memory_space<vmem>>, vector<64x1xf32>
      %cst_17 = arith.constant 3.906250e-03 : f32
      %22 = vector.broadcast %cst_17 : f32 to vector<64x1xf32>
      %23 = arith.mulf %21, %22 : vector<64x1xf32>
      %c0_18 = arith.constant 0 : index
      %c0_19 = arith.constant 0 : index
      %24 = vector.load %arg7[%c0_18, %c0_19] : memref<64x1xf32, #tpu.memory_space<vmem>>, vector<64x1xf32>
      %25 = vector.shape_cast %23 : vector<64x1xf32> to vector<64x1xf32>
      %26 = vector.broadcast %25 : vector<64x1xf32> to vector<64x2xf32>
      %27 = vector.shape_cast %24 : vector<64x1xf32> to vector<64x1xf32>
      %28 = vector.broadcast %27 : vector<64x1xf32> to vector<64x2xf32>
      %29 = arith.select %20, %26, %28 : vector<64x2xi1>, vector<64x2xf32>
      %c0_20 = arith.constant 0 : index
      %c0_21 = arith.constant 0 : index
      %30 = vector.load %arg3[%c0_20, %c0_21] : memref<4x64xf32, #tpu.memory_space<vmem>>, vector<4x64xf32>
      %c0_22 = arith.constant 0 : index
      %c0_23 = arith.constant 0 : index
      %31 = vector.load %arg4[%c0_22, %c0_23] : memref<64x4xf32, #tpu.memory_space<vmem>>, vector<64x4xf32>
      %cst_24 = arith.constant dense<0.000000e+00> : vector<4x2xf32>
      %32 = tpu.matmul %30, %29, %cst_24 {dimension_numbers = #tpu.dot_dimension_numbers<[1], [0], [0], [1], [0, 0, 1, 1], [], []>} : vector<4x64xf32>, vector<64x2xf32>, vector<4x2xf32> -> vector<4x2xf32>
      %cst_25 = arith.constant 0.000000e+00 : f32
      %33 = vector.broadcast %cst_25 : f32 to vector<4x2xf32>
      %34 = arith.maximumf %32, %33 : vector<4x2xf32>
      %cst_26 = arith.constant dense<0.000000e+00> : vector<64x2xf32>
      %35 = tpu.matmul %31, %34, %cst_26 {dimension_numbers = #tpu.dot_dimension_numbers<[1], [0], [0], [1], [0, 0, 1, 1], [], []>} : vector<64x4xf32>, vector<4x2xf32>, vector<64x2xf32> -> vector<64x2xf32>
      %36 = vector.extract_strided_slice %35 {offsets = [0, 0], sizes = [64, 1], strides = [1, 1]} : vector<64x2xf32> to vector<64x1xf32>
      %37 = vector.extract_strided_slice %35 {offsets = [0, 1], sizes = [64, 1], strides = [1, 1]} : vector<64x2xf32> to vector<64x1xf32>
      %38 = arith.addf %36, %37 : vector<64x1xf32>
      %cst_27 = arith.constant 1.000000e+00 : f32
      %39 = vector.broadcast %cst_27 : f32 to vector<1x1xf32>
      %cst_28 = arith.constant dense<0.000000e+00> : vector<1x64xf32>
      %40 = tpu.matmul %39, %38, %cst_28 {dimension_numbers = #tpu.dot_dimension_numbers<[1], [1], [0], [0], [0, 0, 1, 0], [], []>} : vector<1x1xf32>, vector<64x1xf32>, vector<1x64xf32> -> vector<1x64xf32>
      %41 = arith.negf %40 : vector<1x64xf32>
      %42 = math.exp %41 : vector<1x64xf32>
      %cst_29 = arith.constant 1.000000e+00 : f32
      %43 = vector.broadcast %cst_29 : f32 to vector<1x64xf32>
      %44 = arith.addf %43, %42 : vector<1x64xf32>
      %45 = arith.divf %43, %44 : vector<1x64xf32>
      %c0_30 = arith.constant 0 : index
      %c0_31 = arith.constant 0 : index
      %c0_32 = arith.constant 0 : index
      %46 = vector.load %arg5[%c0_30, %c0_31, %c0_32] : memref<1x1x64xf32, #tpu.memory_space<vmem>>, vector<1x1x64xf32>
      %47 = vector.shape_cast %46 : vector<1x1x64xf32> to vector<1x64xf32>
      %48 = vector.shape_cast %45 : vector<1x64xf32> to vector<1x1x64xf32>
      tpu.vector_store %arg5[%c0_30, %c0_31, %c0_32], %48 {strides = array<i32>} : memref<1x1x64xf32, #tpu.memory_space<vmem>>, vector<1x1x64xf32>,
    } else {
    }
    return
  }
  func.func @transform_0(%arg0: i32, %arg1: i32) -> (i32, i32, i32) {
    %c0_i32 = arith.constant 0 : i32
    %c0_i32_0 = arith.constant 0 : i32
    return %arg0, %c0_i32, %arg1 : i32, i32, i32
  }
  func.func @transform_1(%arg0: i32, %arg1: i32) -> (i32, i32) {
    %c0_i32 = arith.constant 0 : i32
    %c0_i32_0 = arith.constant 0 : i32
    %c0_i32_1 = arith.constant 0 : i32
    return %c0_i32, %c0_i32_0 : i32, i32
  }
  func.func @transform_2(%arg0: i32, %arg1: i32) -> (i32, i32) {
    %c0_i32 = arith.constant 0 : i32
    %c0_i32_0 = arith.constant 0 : i32
    %c0_i32_1 = arith.constant 0 : i32
    return %c0_i32, %c0_i32_0 : i32, i32
  }
  func.func @transform_3(%arg0: i32, %arg1: i32) -> (i32, i32, i32) {
    %c0_i32 = arith.constant 0 : i32
    %c0_i32_0 = arith.constant 0 : i32
    %c0_i32_1 = arith.constant 0 : i32
    return %arg0, %c0_i32, %c0_i32_0 : i32, i32, i32
  }
}

</mosaic_0001>

<llo_original>
// kernel: tpu_custom_call.1
$region0: #{tpu_custom_call.1}
  #allocation0 [shape = 'u32[]', space=smem, size = 0x4, offset = 0x4, fixed_abs, tag = 'smem constant byte address 0x4 - core index']
  #allocation1 [shape = 'u32[144,128]{1,0:T(1,128)}', space=vmem, size = 0x12000, scoped, tag = 'internal scratch']
  #allocation2 [shape = 'f32[64,1]{1,0:T(8,128)}', space=vmem, size = 0x8000, scoped, tag = 'scratch operand']
  #allocation3 [shape = 'f32[64,1]{1,0:T(8,128)}', space=vmem, size = 0x8000, scoped, tag = 'scratch operand']
  %s0 = inlined_call_operand.hbm [shape: f32[2,64,256], index: 0, kind: input, shape index: {}]
  %s1 = inlined_call_operand.vmem [shape: f32[4,64], index: 1, kind: input, shape index: {}]
  %s2 = inlined_call_operand.vmem [shape: f32[64,4], index: 2, kind: input, shape index: {}]
  %s3 = inlined_call_operand.hbm [shape: f32[2,1,64], index: 3, kind: output, shape index: {}]
  %s4 = sld [smem:[#allocation0]]
  $region57: #{tpu_custom_call.1} parent=0
    _
  %s6 = ssub.s32 1, %s4
  %s7 = scalar_select 0, %s6, %s4
  $region1: #{tpu_custom_call.1} parent=0
    #allocation4 [shape = 'u8[131072]{0}', space=vmem, size = 0x20000, scoped, tag = 'input window, operand 0']
    #allocation5 [shape = 's32[2]{0}', space=sflag, size = 0x8, scoped, tag = 'scoped memory for tpu_custom_call.1']
    #allocation6 [shape = 's32[2]{0}', space=sflag, size = 0x8, scoped, tag = 'scoped memory for tpu_custom_call.1']
    #allocation7 [shape = 'u8[1024]{0}', space=vmem, size = 0x400, scoped, tag = 'output window, operand 0']
    %8 = vsyncpa [#allocation5], 0
    %s9 = scalar_lea.sflag [#allocation5], 1
    %10 = vsyncpa %s9, 0
    %11 = vsyncpa [#allocation6], 0
    %s12 = scalar_lea.sflag [#allocation6], 1
    %13 = vsyncpa %s12, 0
    loop: start=0, step=1, limit=4
    $region2: #{tpu_custom_call.1} parent=1 // loop_pre_header
      _
    $region3: #{tpu_custom_call.1} parent=1 // loop_header
      %s15 = sphi 0, %s19
      %p16 = scmp.ge.s32.totalorder %s15, 4
      %s22 = sphi 0, %s34
      %s23 = sphi 0, %s30
      %s24 = sphi 0, %s22
      %s25 = sphi 0, %s23
      %s26 = sphi 0, %s24
      %s27 = sphi 0, %s25
      %s39 = sphi 0, %s41
      %s42 = sphi 0, %s39
      %s43 = sphi 0, %s42
      %s59 = sphi 0, %s43
      %s63 = sphi 0, %s63
      %s65 = sphi 0, %s63
      %s66 = sphi 0, %s65
      %s80 = sphi 0, %s66
      %s84 = sphi 0, %s84
      %s86 = sphi 0, %s84
      %s87 = sphi 0, %s86
      %s101 = sphi 0, %s87
      %s107 = sphi 0, %s109
      %s110 = sphi 0, %s107
      %s111 = sphi 0, %s110
      %s127 = sphi 0, %s111
    $region4: #{tpu_custom_call.1} parent=1 // loop_header_branch
      %18 = sbr.rel (%p16) target = $region8
    $region5: #{tpu_custom_call.1} parent=1 // loop_body
      %s20 = ssub.s32 %s15, 1
      %s21 = ssub.s32 %s15, 2
      %s28 = sadd.s32 1, %s23
      %p29 = scmp.ge.s32.totalorder %s28, 1
      %s30 = scalar_select %p29, 0, %s28
      %s31 = sadd.s32 1, %s22
      %s32 = scalar_select %p29, %s31, %s22
      %p33 = scmp.ge.s32.totalorder %s32, 2
      %s34 = scalar_select %p33, 0, %s32
      %s35 = ssub.s32 %s22, %s34
      %s36 = ssub.s32 %s23, %s30
      %s37 = sor.u32 %s35, %s36
      %p38 = scmp.eq.s32.totalorder %s37, 0
      %s40 = sadd.s32 %s39, 1
      %s41 = scalar_select %p38, %s39, %s40
      %p44 = pneg %p38
      %p45 = scmp.eq.s32.totalorder %s15, 1
      %p46 = por %p44, %p45
      %p47 = scmp.ne.s32.totalorder %s39, %s42
      %p48 = scmp.eq.s32.totalorder %s15, 0
      %p49 = por %p47, %p48
      %p50 = scmp.ne.s32.totalorder %s39, %s42
      %p51 = scmp.eq.s32.totalorder %s20, 1
      %p52 = por %p50, %p51
      %p53 = scmp.ne.s32.totalorder %s42, %s43
      %p54 = scmp.eq.s32.totalorder %s20, 0
      %p55 = por %p53, %p54
      %p56 = scmp.ne.s32.totalorder %s42, %s43
      %p57 = scmp.eq.s32.totalorder %s21, 1
      %p58 = por %p56, %p57
      %p60 = scmp.ne.s32.totalorder %s43, %s59
      %p61 = scmp.eq.s32.totalorder %s21, 0
      %p62 = por %p60, %p61
      %s64 = sadd.s32 %s63, 1
      %p67 = scmp.eq.s32.totalorder %s15, 1
      %p68 = scmp.ne.s32.totalorder %s63, %s65
      %p69 = scmp.eq.s32.totalorder %s15, 0
      %p70 = por %p68, %p69
      %p71 = scmp.ne.s32.totalorder %s63, %s65
      %p72 = scmp.eq.s32.totalorder %s20, 1
      %p73 = por %p71, %p72
      %p74 = scmp.ne.s32.totalorder %s65, %s66
      %p75 = scmp.eq.s32.totalorder %s20, 0
      %p76 = por %p74, %p75
      %p77 = scmp.ne.s32.totalorder %s65, %s66
      %p78 = scmp.eq.s32.totalorder %s21, 1
      %p79 = por %p77, %p78
      %p81 = scmp.ne.s32.totalorder %s66, %s80
      %p82 = scmp.eq.s32.totalorder %s21, 0
      %p83 = por %p81, %p82
      %s85 = sadd.s32 %s84, 1
      %p88 = scmp.eq.s32.totalorder %s15, 1
      %p89 = scmp.ne.s32.totalorder %s84, %s86
      %p90 = scmp.eq.s32.totalorder %s15, 0
      %p91 = por %p89, %p90
      %p92 = scmp.ne.s32.totalorder %s84, %s86
      %p93 = scmp.eq.s32.totalorder %s20, 1
      %p94 = por %p92, %p93
      %p95 = scmp.ne.s32.totalorder %s86, %s87
      %p96 = scmp.eq.s32.totalorder %s20, 0
      %p97 = por %p95, %p96
      %p98 = scmp.ne.s32.totalorder %s86, %s87
      %p99 = scmp.eq.s32.totalorder %s21, 1
      %p100 = por %p98, %p99
      %p102 = scmp.ne.s32.totalorder %s87, %s101
      %p103 = scmp.eq.s32.totalorder %s21, 0
      %p104 = por %p102, %p103
      %s105 = ssub.s32 %s22, %s34
      %p106 = scmp.eq.s32.totalorder %s105, 0
      %s108 = sadd.s32 %s107, 1
      %s109 = scalar_select %p106, %s107, %s108
      %p112 = pneg %p106
      %p113 = scmp.eq.s32.totalorder %s15, 1
      %p114 = por %p112, %p113
      %p115 = scmp.ne.s32.totalorder %s107, %s110
      %p116 = scmp.eq.s32.totalorder %s15, 0
      %p117 = por %p115, %p116
      %p118 = scmp.ne.s32.totalorder %s107, %s110
      %p119 = scmp.eq.s32.totalorder %s20, 1
      %p120 = por %p118, %p119
      %p121 = scmp.ne.s32.totalorder %s110, %s111
      %p122 = scmp.eq.s32.totalorder %s20, 0
      %p123 = por %p121, %p122
      %p124 = scmp.ne.s32.totalorder %s110, %s111
      %p125 = scmp.eq.s32.totalorder %s21, 1
      %p126 = por %p124, %p125
      %p128 = scmp.ne.s32.totalorder %s111, %s127
      %p129 = scmp.eq.s32.totalorder %s21, 0
      %p130 = por %p128, %p129
      %p131 = scmp.le.s32.totalorder 1, %s15
      %p132 = scmp.lt.s32.totalorder %s15, 3
      %p133 = pnand %p131, %p132
      %p134 = pneg %p133
      // Predicated region
      $region9: #{tpu_custom_call.1} parent=5 // pred_check
        _
      $region10: #{tpu_custom_call.1} parent=5 // pred_check_branch
        %136 = sbr.rel (%p133) target = $region12
      $region11: #{tpu_custom_call.1} parent=5 // pred_region
        %s137 = ssub.s32 %s15, 1
        // Predicated region
        $region13: #{tpu_custom_call.1} parent=11 // pred_check
          %p138 = pneg %p76
        $region14: #{tpu_custom_call.1} parent=11 // pred_check_branch
          %140 = sbr.rel (%p138) target = $region16
        $region15: #{tpu_custom_call.1} parent=11 // pred_region
          _
        $region16: #{tpu_custom_call.1} parent=11 // pred_fallthru
          _
        // Predicated region
        $region17: #{tpu_custom_call.1} parent=11 // pred_check
          %p141 = pneg %p97
        $region18: #{tpu_custom_call.1} parent=11 // pred_check_branch
          %143 = sbr.rel (%p141) target = $region20
        $region19: #{tpu_custom_call.1} parent=11 // pred_region
          _
        $region20: #{tpu_custom_call.1} parent=11 // pred_fallthru
          _
      $region12: #{tpu_custom_call.1} parent=5 // pred_fallthru
        _
      %p144 = scmp.lt.s32.totalorder %s15, 2
      // Predicated region
      $region21: #{tpu_custom_call.1} parent=5 // pred_check
        %p145 = pneg %p144
      $region22: #{tpu_custom_call.1} parent=5 // pred_check_branch
        %147 = sbr.rel (%p145) target = $region24
      $region23: #{tpu_custom_call.1} parent=5 // pred_region
        // Predicated region
        $region25: #{tpu_custom_call.1} parent=23 // pred_check
          %p148 = pneg %p49
        $region26: #{tpu_custom_call.1} parent=23 // pred_check_branch
          %150 = sbr.rel (%p148) target = $region28
        $region27: #{tpu_custom_call.1} parent=23 // pred_region
          %s151 = sand.u32 %s39, 1
          %s152 = scalar_lea.sflag [#allocation5], %s151
          %s153 = sand.u32 %s39, 1
          %s154 = smul.addr %s153, 128
          %s155 = scalar_lea.vmem [#allocation4], %s154
          %s156 = smul.u32 2, %s23
          %s158 = ssub.s32 2048, 2048
          %159 = vsyncadd %s152, %s158
          %s160 = smul.addr %s22, 16
          %s161 = sadd.s32 %s156, %s160
          %s162 = smul.addr %s161, 128
          %s163 = scalar_lea.hbm %s0, %s162
          %s164 = sshll.u32 %s155, 4
          %s165 = int_to_ptr.vmem [resolvable:$true] %s164
          %170 = dma.hbm_to_vmem [thread:$0]  %s163, 2048, %s165, %s152, 256, 256, 16
        $region28: #{tpu_custom_call.1} parent=23 // pred_fallthru
          _
      $region24: #{tpu_custom_call.1} parent=5 // pred_fallthru
        _
      %p171 = scmp.le.s32.totalorder 1, %s15
      %p172 = scmp.lt.s32.totalorder %s15, 3
      %p173 = pnand %p171, %p172
      %p174 = pneg %p173
      // Predicated region
      $region29: #{tpu_custom_call.1} parent=5 // pred_check
        _
      $region30: #{tpu_custom_call.1} parent=5 // pred_check_branch
        %176 = sbr.rel (%p173) target = $region32
      $region31: #{tpu_custom_call.1} parent=5 // pred_region
        %s177 = ssub.s32 %s15, 1
        %s178 = sand.u32 %s42, 1
        %s179 = scalar_lea.sflag [#allocation5], %s178
        %s180 = sand.u32 %s42, 1
        %s181 = smul.addr %s180, 128
        %s182 = scalar_lea.vmem [#allocation4], %s181
        // Predicated region
        $region33: #{tpu_custom_call.1} parent=31 // pred_check
          %p183 = pneg %p55
        $region34: #{tpu_custom_call.1} parent=31 // pred_check_branch
          %185 = sbr.rel (%p183) target = $region36
        $region35: #{tpu_custom_call.1} parent=31 // pred_region
          %186 = dma.done %s179, 2048
        $region36: #{tpu_custom_call.1} parent=31 // pred_fallthru
          _
        %s187 = sand.u32 %s42, 1
        %s188 = scalar_lea.sflag [#allocation5], %s187
        %s189 = sand.u32 %s42, 1
        %s190 = smul.addr %s189, 128
        %s191 = scalar_lea.vmem [#allocation4], %s190
        %p192 = pneg %p55
        %p193 = pneg %p52
        %p194 = pneg %p76
        %p195 = pneg %p73
        %p196 = pneg %p97
        %p197 = pneg %p94
        %p198 = pneg %p123
        %p199 = pneg %p120
        %s200 = sand.u32 %s110, 1
        %s201 = scalar_lea.sflag [#allocation6], %s200
        %s202 = sand.u32 %s110, 1
        %s203 = scalar_lea.vmem [#allocation7], %s202
        %s204 = smul.u32 2, %s25
        %p205 = scmp.eq.s32.totalorder %s25, 0
        // Predicated region
        $region37: #{tpu_custom_call.1} parent=31 // pred_check
          %p206 = pneg %p205
        $region38: #{tpu_custom_call.1} parent=31 // pred_check_branch
          %208 = sbr.rel (%p206) target = $region40
        $region39: #{tpu_custom_call.1} parent=31 // pred_region
          %vm209 = vcmask 7168
          %210 = vst.msk [vmem:[#allocation2] sm:$0xff] %vm209, 0.0
          %211 = vst.msk [vmem:[#allocation2 + $0x8] sm:$0xff] %vm209, 0.0
          %212 = vst.msk [vmem:[#allocation2 + $0x10] sm:$0xff] %vm209, 0.0
          %213 = vst.msk [vmem:[#allocation2 + $0x18] sm:$0xff] %vm209, 0.0
          %214 = vst.msk [vmem:[#allocation2 + $0x20] sm:$0xff] %vm209, 0.0
          %215 = vst.msk [vmem:[#allocation2 + $0x28] sm:$0xff] %vm209, 0.0
          %216 = vst.msk [vmem:[#allocation2 + $0x30] sm:$0xff] %vm209, 0.0
          %217 = vst.msk [vmem:[#allocation2 + $0x38] sm:$0xff] %vm209, 0.0
          %218 = vst.msk [vmem:[#allocation3] sm:$0xff] %vm209, -inf
          %219 = vst.msk [vmem:[#allocation3 + $0x8] sm:$0xff] %vm209, -inf
          %220 = vst.msk [vmem:[#allocation3 + $0x10] sm:$0xff] %vm209, -inf
          %221 = vst.msk [vmem:[#allocation3 + $0x18] sm:$0xff] %vm209, -inf
          %222 = vst.msk [vmem:[#allocation3 + $0x20] sm:$0xff] %vm209, -inf
          %223 = vst.msk [vmem:[#allocation3 + $0x28] sm:$0xff] %vm209, -inf
          %224 = vst.msk [vmem:[#allocation3 + $0x30] sm:$0xff] %vm209, -inf
          %225 = vst.msk [vmem:[#allocation3 + $0x38] sm:$0xff] %vm209, -inf
        $region40: #{tpu_custom_call.1} parent=31 // pred_fallthru
          _
        %v226 = vld [vmem:[%s182] sm:$0xff]
        %v227 = vld [vmem:[%s182 + $0x8] sm:$0xff]
        %v228 = vld [vmem:[%s182 + $0x10] sm:$0xff]
        %v229 = vld [vmem:[%s182 + $0x18] sm:$0xff]
        %v230 = vld [vmem:[%s182 + $0x20] sm:$0xff]
        %v231 = vld [vmem:[%s182 + $0x28] sm:$0xff]
        %v232 = vld [vmem:[%s182 + $0x30] sm:$0xff]
        %v233 = vld [vmem:[%s182 + $0x38] sm:$0xff]
        %v234 = vld [vmem:[%s182 + $0x40] sm:$0xff]
        %v235 = vld [vmem:[%s182 + $0x48] sm:$0xff]
        %v236 = vld [vmem:[%s182 + $0x50] sm:$0xff]
        %v237 = vld [vmem:[%s182 + $0x58] sm:$0xff]
        %v238 = vld [vmem:[%s182 + $0x60] sm:$0xff]
        %v239 = vld [vmem:[%s182 + $0x68] sm:$0xff]
        %v240 = vld [vmem:[%s182 + $0x70] sm:$0xff]
        %v241 = vld [vmem:[%s182 + $0x78] sm:$0xff]
        %v242 = vld [vmem:[#allocation2] sm:$0xff]
        %v243 = vld [vmem:[#allocation2 + $0x8] sm:$0xff]
        %v244 = vld [vmem:[#allocation2 + $0x10] sm:$0xff]
        %v245 = vld [vmem:[#allocation2 + $0x18] sm:$0xff]
        %v246 = vld [vmem:[#allocation2 + $0x20] sm:$0xff]
        %v247 = vld [vmem:[#allocation2 + $0x28] sm:$0xff]
        %v248 = vld [vmem:[#allocation2 + $0x30] sm:$0xff]
        %v249 = vld [vmem:[#allocation2 + $0x38] sm:$0xff]
        %v250 = vadd.f32 %v226, %v227
        %251 = vadd.xlane.f32.xlu0 %v250
        %v252 = vpop.xlane.xlu0 %251
        %v253 = vadd.f32 %v228, %v229
        %254 = vadd.xlane.f32.xlu0 %v253
        %v255 = vpop.xlane.xlu0 %254
        %v256 = vadd.f32 %v230, %v231
        %257 = vadd.xlane.f32.xlu0 %v256
        %v258 = vpop.xlane.xlu0 %257
        %v259 = vadd.f32 %v232, %v233
        %260 = vadd.xlane.f32.xlu0 %v259
        %v261 = vpop.xlane.xlu0 %260
        %v262 = vadd.f32 %v234, %v235
        %263 = vadd.xlane.f32.xlu0 %v262
        %v264 = vpop.xlane.xlu0 %263
        %v265 = vadd.f32 %v236, %v237
        %266 = vadd.xlane.f32.xlu0 %v265
        %v267 = vpop.xlane.xlu0 %266
        %v268 = vadd.f32 %v238, %v239
        %269 = vadd.xlane.f32.xlu0 %v268
        %v270 = vpop.xlane.xlu0 %269
        %v271 = vadd.f32 %v240, %v241
        %272 = vadd.xlane.f32.xlu0 %v271
        %v273 = vpop.xlane.xlu0 %272
        %v274 = vadd.f32 %v242, %v252
        %v275 = vadd.f32 %v243, %v255
        %v276 = vadd.f32 %v244, %v258
        %v277 = vadd.f32 %v245, %v261
        %v278 = vadd.f32 %v246, %v264
        %v279 = vadd.f32 %v247, %v267
        %v280 = vadd.f32 %v248, %v270
        %v281 = vadd.f32 %v249, %v273
        %vm282 = vcmask 7168
        %283 = vst.msk [vmem:[#allocation2] sm:$0xff] %vm282, %v274
        %284 = vst.msk [vmem:[#allocation2 + $0x8] sm:$0xff] %vm282, %v275
        %285 = vst.msk [vmem:[#allocation2 + $0x10] sm:$0xff] %vm282, %v276
        %286 = vst.msk [vmem:[#allocation2 + $0x18] sm:$0xff] %vm282, %v277
        %287 = vst.msk [vmem:[#allocation2 + $0x20] sm:$0xff] %vm282, %v278
        %288 = vst.msk [vmem:[#allocation2 + $0x28] sm:$0xff] %vm282, %v279
        %289 = vst.msk [vmem:[#allocation2 + $0x30] sm:$0xff] %vm282, %v280
        %290 = vst.msk [vmem:[#allocation2 + $0x38] sm:$0xff] %vm282, %v281
        %v291 = vld [vmem:[#allocation3] sm:$0xff]
        %v292 = vld [vmem:[#allocation3 + $0x8] sm:$0xff]
        %v293 = vld [vmem:[#allocation3 + $0x10] sm:$0xff]
        %v294 = vld [vmem:[#allocation3 + $0x18] sm:$0xff]
        %v295 = vld [vmem:[#allocation3 + $0x20] sm:$0xff]
        %v296 = vld [vmem:[#allocation3 + $0x28] sm:$0xff]
        %v297 = vld [vmem:[#allocation3 + $0x30] sm:$0xff]
        %v298 = vld [vmem:[#allocation3 + $0x38] sm:$0xff]
        %v299 = vmax.f32 %v226, %v227
        %300 = vmax.xlane.f32.xlu0 %v299
        %v301 = vpop.xlane.xlu0 %300
        %v302 = vmax.f32 %v228, %v229
        %303 = vmax.xlane.f32.xlu0 %v302
        %v304 = vpop.xlane.xlu0 %303
        %v305 = vmax.f32 %v230, %v231
        %306 = vmax.xlane.f32.xlu0 %v305
        %v307 = vpop.xlane.xlu0 %306
        %v308 = vmax.f32 %v232, %v233
        %309 = vmax.xlane.f32.xlu0 %v308
        %v310 = vpop.xlane.xlu0 %309
        %v311 = vmax.f32 %v234, %v235
        %312 = vmax.xlane.f32.xlu0 %v311
        %v313 = vpop.xlane.xlu0 %312
        %v314 = vmax.f32 %v236, %v237
        %315 = vmax.xlane.f32.xlu0 %v314
        %v316 = vpop.xlane.xlu0 %315
        %v317 = vmax.f32 %v238, %v239
        %318 = vmax.xlane.f32.xlu0 %v317
        %v319 = vpop.xlane.xlu0 %318
        %v320 = vmax.f32 %v240, %v241
        %321 = vmax.xlane.f32.xlu0 %v320
        %v322 = vpop.xlane.xlu0 %321
        %v323 = vmax.f32 %v291, %v301
        %v324 = vmax.f32 %v292, %v304
        %v325 = vmax.f32 %v293, %v307
        %v326 = vmax.f32 %v294, %v310
        %v327 = vmax.f32 %v295, %v313
        %v328 = vmax.f32 %v296, %v316
        %v329 = vmax.f32 %v297, %v319
        %v330 = vmax.f32 %v298, %v322
        %331 = vst.msk [vmem:[#allocation3] sm:$0xff] %vm282, %v323
        %332 = vst.msk [vmem:[#allocation3 + $0x8] sm:$0xff] %vm282, %v324
        %333 = vst.msk [vmem:[#allocation3 + $0x10] sm:$0xff] %vm282, %v325
        %334 = vst.msk [vmem:[#allocation3 + $0x18] sm:$0xff] %vm282, %v326
        %335 = vst.msk [vmem:[#allocation3 + $0x20] sm:$0xff] %vm282, %v327
        %336 = vst.msk [vmem:[#allocation3 + $0x28] sm:$0xff] %vm282, %v328
        %337 = vst.msk [vmem:[#allocation3 + $0x30] sm:$0xff] %vm282, %v329
        %338 = vst.msk [vmem:[#allocation3 + $0x38] sm:$0xff] %vm282, %v330
        // Predicated region
        $region41: #{tpu_custom_call.1} parent=31 // pred_check
          %p339 = pneg %p205
        $region42: #{tpu_custom_call.1} parent=31 // pred_check_branch
          %341 = sbr.rel (%p339) target = $region44
        $region43: #{tpu_custom_call.1} parent=31 // pred_region
          %v342 = vlaneseq
          %v343 = vand.u32 %v342, 127
          %vm344 = vcmp.eq.s32.totalorder %v343, 0
          %v345 = vld [vmem:[#allocation2] sm:$0xff]
          %v346 = vld [vmem:[#allocation2 + $0x8] sm:$0xff]
          %v347 = vld [vmem:[#allocation2 + $0x10] sm:$0xff]
          %v348 = vld [vmem:[#allocation2 + $0x18] sm:$0xff]
          %v349 = vld [vmem:[#allocation2 + $0x20] sm:$0xff]
          %v350 = vld [vmem:[#allocation2 + $0x28] sm:$0xff]
          %v351 = vld [vmem:[#allocation2 + $0x30] sm:$0xff]
          %v352 = vld [vmem:[#allocation2 + $0x38] sm:$0xff]
          %v353 = vmul.f32 %v345, 0.00390625
          %v354 = vmul.f32 %v346, 0.00390625
          %v355 = vmul.f32 %v347, 0.00390625
          %v356 = vmul.f32 %v348, 0.00390625
          %v357 = vmul.f32 %v349, 0.00390625
          %v358 = vmul.f32 %v350, 0.00390625
          %v359 = vmul.f32 %v351, 0.00390625
          %v360 = vmul.f32 %v352, 0.00390625
          %v361 = vld [vmem:[#allocation3] sm:$0xff]
          %v362 = vld [vmem:[#allocation3 + $0x8] sm:$0xff]
          %v363 = vld [vmem:[#allocation3 + $0x10] sm:$0xff]
          %v364 = vld [vmem:[#allocation3 + $0x18] sm:$0xff]
          %v365 = vld [vmem:[#allocation3 + $0x20] sm:$0xff]
          %v366 = vld [vmem:[#allocation3 + $0x28] sm:$0xff]
          %v367 = vld [vmem:[#allocation3 + $0x30] sm:$0xff]
          %v368 = vld [vmem:[#allocation3 + $0x38] sm:$0xff]
          %370 = vset.pattern.permute.xlu0 0
          %371 = vperm.xlu0 %370, %v353
          %v372 = vpop.permute.xlu0 %371
          %375 = vset.pattern.permute.xlu0 0
          %376 = vperm.xlu0 %375, %v354
          %v377 = vpop.permute.xlu0 %376
          %380 = vset.pattern.permute.xlu0 0
          %381 = vperm.xlu0 %380, %v355
          %v382 = vpop.permute.xlu0 %381
          %385 = vset.pattern.permute.xlu0 0
          %386 = vperm.xlu0 %385, %v356
          %v387 = vpop.permute.xlu0 %386
          %390 = vset.pattern.permute.xlu0 0
          %391 = vperm.xlu0 %390, %v357
          %v392 = vpop.permute.xlu0 %391
          %395 = vset.pattern.permute.xlu0 0
          %396 = vperm.xlu0 %395, %v358
          %v397 = vpop.permute.xlu0 %396
          %400 = vset.pattern.permute.xlu0 0
          %401 = vperm.xlu0 %400, %v359
          %v402 = vpop.permute.xlu0 %401
          %405 = vset.pattern.permute.xlu0 0
          %406 = vperm.xlu0 %405, %v360
          %v407 = vpop.permute.xlu0 %406
          %410 = vset.pattern.permute.xlu0 0
          %411 = vperm.xlu0 %410, %v361
          %v412 = vpop.permute.xlu0 %411
          %415 = vset.pattern.permute.xlu0 0
          %416 = vperm.xlu0 %415, %v362
          %v417 = vpop.permute.xlu0 %416
          %420 = vset.pattern.permute.xlu0 0
          %421 = vperm.xlu0 %420, %v363
          %v422 = vpop.permute.xlu0 %421
          %425 = vset.pattern.permute.xlu0 0
          %426 = vperm.xlu0 %425, %v364
          %v427 = vpop.permute.xlu0 %426
          %430 = vset.pattern.permute.xlu0 0
          %431 = vperm.xlu0 %430, %v365
          %v432 = vpop.permute.xlu0 %431
          %435 = vset.pattern.permute.xlu0 0
          %436 = vperm.xlu0 %435, %v366
          %v437 = vpop.permute.xlu0 %436
          %440 = vset.pattern.permute.xlu0 0
          %441 = vperm.xlu0 %440, %v367
          %v442 = vpop.permute.xlu0 %441
          %445 = vset.pattern.permute.xlu0 0
          %446 = vperm.xlu0 %445, %v368
          %v447 = vpop.permute.xlu0 %446
          %v449 = vsel %vm344, %v372, %v412
          %v450 = vsel %vm344, %v377, %v417
          %v451 = vsel %vm344, %v382, %v422
          %v452 = vsel %vm344, %v387, %v427
          %v453 = vsel %vm344, %v392, %v432
          %v454 = vsel %vm344, %v397, %v437
          %v455 = vsel %vm344, %v402, %v442
          %v456 = vsel %vm344, %v407, %v447
          %v457 = vld [vmem:[%s1] sm:$0xf]
          %v458 = vld [vmem:[%s2] sm:$0xff]
          %v459 = vld [vmem:[%s2 + $0x8] sm:$0xff]
          %v460 = vld [vmem:[%s2 + $0x10] sm:$0xff]
          %v461 = vld [vmem:[%s2 + $0x18] sm:$0xff]
          %v462 = vld [vmem:[%s2 + $0x20] sm:$0xff]
          %v463 = vld [vmem:[%s2 + $0x28] sm:$0xff]
          %v464 = vld [vmem:[%s2 + $0x30] sm:$0xff]
          %v465 = vld [vmem:[%s2 + $0x38] sm:$0xff]
          %vm466 = vcmask 523264
          %v468 = vsel %vm466, %v457, 0
          %470 = vmatprep.subr.mxu0 0.0
          %471 = vmatpush1.msra.mxu0 %v449
          %472 = vmatprep.subr.mxu0 0.0
          %473 = vmatpush1.msra.mxu0 %v450
          %474 = vmatprep.subr.mxu0 0.0
          %475 = vmatpush1.msra.mxu0 %v451
          %476 = vmatprep.subr.mxu0 0.0
          %477 = vmatpush1.msra.mxu0 %v452
          %478 = vmatprep.subr.mxu0 0.0
          %479 = vmatpush1.msra.mxu0 %v453
          %480 = vmatprep.subr.mxu0 0.0
          %481 = vmatpush1.msra.mxu0 %v454
          %482 = vmatprep.subr.mxu0 0.0
          %483 = vmatpush1.msra.mxu0 %v455
          %484 = vmatprep.subr.mxu0 0.0
          %485 = vmatpush1.msra.mxu0 %v456
          %486 = vmatprep.subr.mxu0 0.0
          %487 = vmatpush1.msra.mxu0 0.0
          %488 = vmatprep.subr.mxu0 0.0
          %489 = vmatpush1.msra.mxu0 0.0
          %490 = vmatprep.subr.mxu0 0.0
          %491 = vmatpush1.msra.mxu0 0.0
          %492 = vmatprep.subr.mxu0 0.0
          %493 = vmatpush1.msra.mxu0 0.0
          %494 = vmatprep.subr.mxu0 0.0
          %495 = vmatpush1.msra.mxu0 0.0
          %496 = vmatprep.subr.mxu0 0.0
          %497 = vmatpush1.msra.mxu0 0.0
          %498 = vmatprep.subr.mxu0 0.0
          %499 = vmatpush1.msra.mxu0 0.0
          %500 = vmatprep.subr.mxu0 0.0
          %501 = vmatpush1.msra.mxu0 0.0
          %502 = vmatprep.subr.mxu0 0.0
          %503 = vmatpush1.msra.mxu0 0.0
          %504 = vmatprep.subr.mxu0 0.0
          %505 = vmatpush1.msra.mxu0 0.0
          %506 = vmatprep.subr.mxu0 0.0
          %507 = vmatpush1.msra.mxu0 0.0
          %508 = vmatprep.subr.mxu0 0.0
          %509 = vmatpush1.msra.mxu0 0.0
          %510 = vmatprep.subr.mxu0 0.0
          %511 = vmatpush1.msra.mxu0 0.0
          %512 = vmatprep.subr.mxu0 0.0
          %513 = vmatpush1.msra.mxu0 0.0
          %514 = vmatprep.subr.mxu0 0.0
          %515 = vmatpush1.msra.mxu0 0.0
          %516 = vmatprep.subr.mxu0 0.0
          %517 = vmatpush1.msra.mxu0 0.0
          %518 = vmatprep.subr.mxu0 0.0
          %519 = vmatpush1.msra.mxu0 0.0
          %520 = vmatprep.subr.mxu0 0.0
          %521 = vmatpush1.msra.mxu0 0.0
          %522 = vmatprep.subr.mxu0 0.0
          %523 = vmatpush1.msra.mxu0 0.0
          %524 = vmatprep.subr.mxu0 0.0
          %525 = vmatpush1.msra.mxu0 0.0
          %526 = vmatprep.subr.mxu0 0.0
          %527 = vmatpush1.msra.mxu0 0.0
          %528 = vmatprep.subr.mxu0 0.0
          %529 = vmatpush1.msra.mxu0 0.0
          %530 = vmatprep.subr.mxu0 0.0
          %531 = vmatpush1.msra.mxu0 0.0
          %532 = vmatprep.subr.mxu0 0.0
          %533 = vmatpush1.msra.mxu0 0.0
          %534 = vmatprep.mubr.f32.mxu0 0.0
          %535 = vmatmul.mubr.f32.gmra.mrb[0].mxu0 %v468
          %v536 = vpop.f32.mrb[0].mxu0
          %v537 = vadd.f32 0.0, %v536
          %v538 = vpop.f32.mrb[0].mxu0
          %539 = vdwg.mxu0
          %v540 = vmax.f32 %v537, 0.0
          %vm541 = vcmask 31744
          %v543 = vsel %vm541, %v458, 0
          %v546 = vsel %vm541, %v459, 0
          %v549 = vsel %vm541, %v460, 0
          %v552 = vsel %vm541, %v461, 0
          %v555 = vsel %vm541, %v462, 0
          %v558 = vsel %vm541, %v463, 0
          %v561 = vsel %vm541, %v464, 0
          %v564 = vsel %vm541, %v465, 0
          %vm566 = vcmask 1043456
          %v568 = vsel %vm566, %v540, 0
          %570 = vmatprep.subr.mxu0 0.0
          %571 = vmatpush1.msra.mxu0 %v568
          %572 = vmatprep.subr.mxu0 0.0
          %573 = vmatpush1.msra.mxu0 0.0
          %574 = vmatprep.subr.mxu0 0.0
          %575 = vmatpush1.msra.mxu0 0.0
          %576 = vmatprep.subr.mxu0 0.0
          %577 = vmatpush1.msra.mxu0 0.0
          %578 = vmatprep.subr.mxu0 0.0
          %579 = vmatpush1.msra.mxu0 0.0
          %580 = vmatprep.subr.mxu0 0.0
          %581 = vmatpush1.msra.mxu0 0.0
          %582 = vmatprep.subr.mxu0 0.0
          %583 = vmatpush1.msra.mxu0 0.0
          %584 = vmatprep.subr.mxu0 0.0
          %585 = vmatpush1.msra.mxu0 0.0
          %586 = vmatprep.subr.mxu0 0.0
          %587 = vmatpush1.msra.mxu0 0.0
          %588 = vmatprep.subr.mxu0 0.0
          %589 = vmatpush1.msra.mxu0 0.0
          %590 = vmatprep.subr.mxu0 0.0
          %591 = vmatpush1.msra.mxu0 0.0
          %592 = vmatprep.subr.mxu0 0.0
          %593 = vmatpush1.msra.mxu0 0.0
          %594 = vmatprep.subr.mxu0 0.0
          %595 = vmatpush1.msra.mxu0 0.0
          %596 = vmatprep.subr.mxu0 0.0
          %597 = vmatpush1.msra.mxu0 0.0
          %598 = vmatprep.subr.mxu0 0.0
          %599 = vmatpush1.msra.mxu0 0.0
          %600 = vmatprep.subr.mxu0 0.0
          %601 = vmatpush1.msra.mxu0 0.0
          %602 = vmatprep.subr.mxu0 0.0
          %603 = vmatpush1.msra.mxu0 0.0
          %604 = vmatprep.subr.mxu0 0.0
          %605 = vmatpush1.msra.mxu0 0.0
          %606 = vmatprep.subr.mxu0 0.0
          %607 = vmatpush1.msra.mxu0 0.0
          %608 = vmatprep.subr.mxu0 0.0
          %609 = vmatpush1.msra.mxu0 0.0
          %610 = vmatprep.subr.mxu0 0.0
          %611 = vmatpush1.msra.mxu0 0.0
          %612 = vmatprep.subr.mxu0 0.0
          %613 = vmatpush1.msra.mxu0 0.0
          %614 = vmatprep.subr.mxu0 0.0
          %615 = vmatpush1.msra.mxu0 0.0
          %616 = vmatprep.subr.mxu0 0.0
          %617 = vmatpush1.msra.mxu0 0.0
          %618 = vmatprep.subr.mxu0 0.0
          %619 = vmatpush1.msra.mxu0 0.0
          %620 = vmatprep.subr.mxu0 0.0
          %621 = vmatpush1.msra.mxu0 0.0
          %622 = vmatprep.subr.mxu0 0.0
          %623 = vmatpush1.msra.mxu0 0.0
          %624 = vmatprep.subr.mxu0 0.0
          %625 = vmatpush1.msra.mxu0 0.0
          %626 = vmatprep.subr.mxu0 0.0
          %627 = vmatpush1.msra.mxu0 0.0
          %628 = vmatprep.subr.mxu0 0.0
          %629 = vmatpush1.msra.mxu0 0.0
          %630 = vmatprep.subr.mxu0 0.0
          %631 = vmatpush1.msra.mxu0 0.0
          %632 = vmatprep.subr.mxu0 0.0
          %633 = vmatpush1.msra.mxu0 0.0
          %634 = vmatprep.mubr.f32.mxu0 0.0
          %635 = vmatmul.mubr.f32.gmra.mrb[0].mxu0 %v543
          %v636 = vpop.f32.mrb[0].mxu0
          %v637 = vadd.f32 0.0, %v636
          %v638 = vpop.f32.mrb[0].mxu0
          %639 = vmatprep.mubr.f32.mxu0 0.0
          %640 = vmatmul.mubr.f32.gmra.mrb[0].mxu0 %v546
          %v641 = vpop.f32.mrb[0].mxu0
          %v642 = vadd.f32 0.0, %v641
          %v643 = vpop.f32.mrb[0].mxu0
          %644 = vmatprep.mubr.f32.mxu0 0.0
          %645 = vmatmul.mubr.f32.gmra.mrb[0].mxu0 %v549
          %v646 = vpop.f32.mrb[0].mxu0
          %v647 = vadd.f32 0.0, %v646
          %v648 = vpop.f32.mrb[0].mxu0
          %649 = vmatprep.mubr.f32.mxu0 0.0
          %650 = vmatmul.mubr.f32.gmra.mrb[0].mxu0 %v552
          %v651 = vpop.f32.mrb[0].mxu0
          %v652 = vadd.f32 0.0, %v651
          %v653 = vpop.f32.mrb[0].mxu0
          %654 = vmatprep.mubr.f32.mxu0 0.0
          %655 = vmatmul.mubr.f32.gmra.mrb[0].mxu0 %v555
          %v656 = vpop.f32.mrb[0].mxu0
          %v657 = vadd.f32 0.0, %v656
          %v658 = vpop.f32.mrb[0].mxu0
          %659 = vmatprep.mubr.f32.mxu0 0.0
          %660 = vmatmul.mubr.f32.gmra.mrb[0].mxu0 %v558
          %v661 = vpop.f32.mrb[0].mxu0
          %v662 = vadd.f32 0.0, %v661
          %v663 = vpop.f32.mrb[0].mxu0
          %664 = vmatprep.mubr.f32.mxu0 0.0
          %665 = vmatmul.mubr.f32.gmra.mrb[0].mxu0 %v561
          %v666 = vpop.f32.mrb[0].mxu0
          %v667 = vadd.f32 0.0, %v666
          %v668 = vpop.f32.mrb[0].mxu0
          %669 = vmatprep.mubr.f32.mxu0 0.0
          %670 = vmatmul.mubr.f32.gmra.mrb[0].mxu0 %v564
          %v671 = vpop.f32.mrb[0].mxu0
          %v672 = vadd.f32 0.0, %v671
          %v673 = vpop.f32.mrb[0].mxu0
          %674 = vdwg.mxu0
          %683 = vrot.lane.b32.xlu0 %v637, 127
          %v684 = vpop.permute.xlu0 %683
          %685 = vrot.lane.b32.xlu0 %v642, 127
          %v686 = vpop.permute.xlu0 %685
          %687 = vrot.lane.b32.xlu0 %v647, 127
          %v688 = vpop.permute.xlu0 %687
          %689 = vrot.lane.b32.xlu0 %v652, 127
          %v690 = vpop.permute.xlu0 %689
          %691 = vrot.lane.b32.xlu0 %v657, 127
          %v692 = vpop.permute.xlu0 %691
          %693 = vrot.lane.b32.xlu0 %v662, 127
          %v694 = vpop.permute.xlu0 %693
          %695 = vrot.lane.b32.xlu0 %v667, 127
          %v696 = vpop.permute.xlu0 %695
          %697 = vrot.lane.b32.xlu0 %v672, 127
          %v698 = vpop.permute.xlu0 %697
          %v707 = vadd.f32 %v637, %v684
          %v708 = vadd.f32 %v642, %v686
          %v709 = vadd.f32 %v647, %v688
          %v710 = vadd.f32 %v652, %v690
          %v711 = vadd.f32 %v657, %v692
          %v712 = vadd.f32 %v662, %v694
          %v713 = vadd.f32 %v667, %v696
          %v714 = vadd.f32 %v672, %v698
          %v716 = vsel %vm282, 1.0, 0
          %v719 = vsel %vm282, %v707, 0
          %v722 = vsel %vm282, %v708, 0
          %v725 = vsel %vm282, %v709, 0
          %v728 = vsel %vm282, %v710, 0
          %v731 = vsel %vm282, %v711, 0
          %v734 = vsel %vm282, %v712, 0
          %v737 = vsel %vm282, %v713, 0
          %v740 = vsel %vm282, %v714, 0
          %742 = vmatprep.subr.mxu0 0.0
          %743 = vmatpush1.xpose.msra.mxu0 %v719
          %744 = vmatprep.subr.mxu0 0.0
          %745 = vmatpush1.xpose.msra.mxu0 %v722
          %746 = vmatprep.subr.mxu0 0.0
          %747 = vmatpush1.xpose.msra.mxu0 %v725
          %748 = vmatprep.subr.mxu0 0.0
          %749 = vmatpush1.xpose.msra.mxu0 %v728
          %750 = vmatprep.subr.mxu0 0.0
          %751 = vmatpush1.xpose.msra.mxu0 %v731
          %752 = vmatprep.subr.mxu0 0.0
          %753 = vmatpush1.xpose.msra.mxu0 %v734
          %754 = vmatprep.subr.mxu0 0.0
          %755 = vmatpush1.xpose.msra.mxu0 %v737
          %756 = vmatprep.subr.mxu0 0.0
          %757 = vmatpush1.xpose.msra.mxu0 %v740
          %758 = vmatprep.subr.mxu0 0.0
          %759 = vmatpush1.xpose.msra.mxu0 0.0
          %760 = vmatprep.subr.mxu0 0.0
          %761 = vmatpush1.xpose.msra.mxu0 0.0
          %762 = vmatprep.subr.mxu0 0.0
          %763 = vmatpush1.xpose.msra.mxu0 0.0
          %764 = vmatprep.subr.mxu0 0.0
          %765 = vmatpush1.xpose.msra.mxu0 0.0
          %766 = vmatprep.subr.mxu0 0.0
          %767 = vmatpush1.xpose.msra.mxu0 0.0
          %768 = vmatprep.subr.mxu0 0.0
          %769 = vmatpush1.xpose.msra.mxu0 0.0
          %770 = vmatprep.subr.mxu0 0.0
          %771 = vmatpush1.xpose.msra.mxu0 0.0
          %772 = vmatprep.subr.mxu0 0.0
          %773 = vmatpush1.xpose.msra.mxu0 0.0
          %774 = vmatprep.subr.mxu0 0.0
          %775 = vmatpush1.xpose.msra.mxu0 0.0
          %776 = vmatprep.subr.mxu0 0.0
          %777 = vmatpush1.xpose.msra.mxu0 0.0
          %778 = vmatprep.subr.mxu0 0.0
          %779 = vmatpush1.xpose.msra.mxu0 0.0
          %780 = vmatprep.subr.mxu0 0.0
          %781 = vmatpush1.xpose.msra.mxu0 0.0
          %782 = vmatprep.subr.mxu0 0.0
          %783 = vmatpush1.xpose.msra.mxu0 0.0
          %784 = vmatprep.subr.mxu0 0.0
          %785 = vmatpush1.xpose.msra.mxu0 0.0
          %786 = vmatprep.subr.mxu0 0.0
          %787 = vmatpush1.xpose.msra.mxu0 0.0
          %788 = vmatprep.subr.mxu0 0.0
          %789 = vmatpush1.xpose.msra.mxu0 0.0
          %790 = vmatprep.subr.mxu0 0.0
          %791 = vmatpush1.xpose.msra.mxu0 0.0
          %792 = vmatprep.subr.mxu0 0.0
          %793 = vmatpush1.xpose.msra.mxu0 0.0
          %794 = vmatprep.subr.mxu0 0.0
          %795 = vmatpush1.xpose.msra.mxu0 0.0
          %796 = vmatprep.subr.mxu0 0.0
          %797 = vmatpush1.xpose.msra.mxu0 0.0
          %798 = vmatprep.subr.mxu0 0.0
          %799 = vmatpush1.xpose.msra.mxu0 0.0
          %800 = vmatprep.subr.mxu0 0.0
          %801 = vmatpush1.xpose.msra.mxu0 0.0
          %802 = vmatprep.subr.mxu0 0.0
          %803 = vmatpush1.xpose.msra.mxu0 0.0
          %804 = vmatprep.subr.mxu0 0.0
          %805 = vmatpush1.xpose.msra.mxu0 0.0
          %806 = vmatprep.mubr.f32.mxu0 0.0
          %807 = vmatmul.mubr.f32.gmra.mrb[0].mxu0 %v716
          %v808 = vpop.f32.mrb[0].mxu0
          %v809 = vadd.f32 0.0, %v808
          %v810 = vpop.f32.mrb[0].mxu0
          %811 = vdwg.mxu0
          %v812 = vxor.u32 %v809, 2147483648
          %v813 = vmul.f32 %v812, 1.442695
          %v814 = vpow.pop %v813
          %v815 = vadd.f32 %v814, 1.0
          %v816 = vrcp.pop %v815
          %v817 = vmul.f32 1.0, %v816
          %vm818 = vcmask 516096
          %819 = vst.msk [vmem:[%s203] sm:$0x1] %vm818, %v817
        $region44: #{tpu_custom_call.1} parent=31 // pred_fallthru
          _
        %s820 = sand.u32 %s110, 1
        %s821 = scalar_lea.sflag [#allocation6], %s820
        %s822 = sand.u32 %s110, 1
        %s823 = scalar_lea.vmem [#allocation7], %s822
        // Predicated region
        $region45: #{tpu_custom_call.1} parent=31 // pred_check
          %p824 = pneg %p120
        $region46: #{tpu_custom_call.1} parent=31 // pred_check_branch
          %826 = sbr.rel (%p824) target = $region48
        $region47: #{tpu_custom_call.1} parent=31 // pred_region
          %s828 = ssub.s32 16, 16
          %829 = vsyncadd %s821, %s828
          %s830 = smul.addr %s24, 16
          %s831 = scalar_lea.hbm %s3, %s830
          %s833 = sshll.u32 %s823, 4
          %s834 = int_to_ptr.vmem [resolvable:$true] %s833
          %836 = dma.vmem_to_hbm [thread:$0]  %s834, 16, %s831, %s821
        $region48: #{tpu_custom_call.1} parent=31 // pred_fallthru
          _
      $region32: #{tpu_custom_call.1} parent=5 // pred_fallthru
        _
      %p837 = scmp.le.s32.totalorder 2, %s15
      // Predicated region
      $region49: #{tpu_custom_call.1} parent=5 // pred_check
        %p838 = pneg %p837
      $region50: #{tpu_custom_call.1} parent=5 // pred_check_branch
        %840 = sbr.rel (%p838) target = $region52
      $region51: #{tpu_custom_call.1} parent=5 // pred_region
        %s841 = ssub.s32 %s15, 2
        // Predicated region
        $region53: #{tpu_custom_call.1} parent=51 // pred_check
          %p842 = pneg %p126
        $region54: #{tpu_custom_call.1} parent=51 // pred_check_branch
          %844 = sbr.rel (%p842) target = $region56
        $region55: #{tpu_custom_call.1} parent=51 // pred_region
          %s845 = sand.u32 %s111, 1
          %s846 = scalar_lea.sflag [#allocation6], %s845
          %s847 = sand.u32 %s111, 1
          %s848 = scalar_lea.vmem [#allocation7], %s847
          %849 = dma.done %s846, 16
        $region56: #{tpu_custom_call.1} parent=51 // pred_fallthru
          _
      $region52: #{tpu_custom_call.1} parent=5 // pred_fallthru
        _
    $region6: #{tpu_custom_call.1} parent=1 // loop_footer
      %s19 = sadd.s32 1, %s15
    $region7: #{tpu_custom_call.1} parent=1 // loop_footer_branch
      %14 = sbr.rel target = $region3
    $region8: #{tpu_custom_call.1} parent=1 // loop_exit
      _
    %850 = vsyncpa [#allocation5], 1
    %s851 = scalar_lea.sflag [#allocation5], 1
    %852 = vsyncpa %s851, 1
    %853 = vsyncpa [#allocation6], 1
    %s854 = scalar_lea.sflag [#allocation6], 1
    %855 = vsyncpa %s854, 1

</llo_original>
